<compile_context>
chip_gen: v7x
topology: tpu7x:2x2x1
jax: 0.10.0
libtpu: 0.0.40
codegen_flags: <defaults>
</compile_context>

<pallas_src>
import functools

import jax
import jax.numpy as jnp
from jax.experimental import pallas as pl
from jax.experimental.pallas import tpu as pltpu


# --------------------------------------------------------------------------
# Helpers
# --------------------------------------------------------------------------

def _round_up(v: int, m: int) -> int:
    return ((v + m - 1) // m) * m


def _generation_params():
    """(per-block byte budget, vmem_limit_bytes or None) for this TPU gen."""
    try:
        kind = jax.devices()[0].device_kind.lower()
    except Exception:
        kind = ""
    if "v7" in kind:   # 64 MiB VMEM / TC, 3.2 TB/s HBM: moderate blocks
        return 5 * (1 << 20), 48 * (1 << 20)
    if "v6" in kind:   # 128 MiB VMEM, 1.4 TB/s HBM: big blocks
        return 8 * (1 << 20), 64 * (1 << 20)
    if "v5" in kind:   # 16 MiB default scoped VMEM: stay small
        return int(1.5 * (1 << 20)), None
    return 2 * (1 << 20), None


def _compiler_params(dim_sem, vmem_limit):
    if vmem_limit is None:
        return pltpu.CompilerParams(dimension_semantics=dim_sem)
    return pltpu.CompilerParams(dimension_semantics=dim_sem,
                                vmem_limit_bytes=vmem_limit)


def _choose_channel_block(C: int, row_bytes: int, budget: int) -> int:
    """Channels per grid step: multiple of 8 (or full C when C < 8)."""
    if C < 8:
        return C
    max_cb = max(8, (budget // max(row_bytes, 1)) // 8 * 8)
    # Keep >= 4 grid steps (>= 2 for smaller C) so the pipeline can overlap
    # HBM read / compute / writeback and v7x can use both TensorCores.
    target_steps = 4 if C >= 32 else (2 if C >= 16 else 1)
    desired = _round_up(-(-C // target_steps), 8)
    return max(8, min(max_cb, desired))


# --------------------------------------------------------------------------
# Kernels
# --------------------------------------------------------------------------

def _scale_channelwise_kernel(x_ref, o_ref):
    # (Cb, H*W) block. abs/max are exact in the input dtype; only the (Cb, 1)
    # max is upcast, so no full-tile f32 temporary stays live in VMEM.
    m = jnp.max(jnp.abs(x_ref[...]), axis=-1, keepdims=True).astype(jnp.float32)
    inv = pl.reciprocal(m)                         # exact; only Cb scalars
    o_ref[...] = (x_ref[...].astype(jnp.float32) * inv).astype(o_ref.dtype)


def _absmax_kernel(x_ref, m_ref, *, hw, thw):
    # HW-tiled pass 1: running per-channel max(|x|) with a resident output.
    hj = pl.program_id(1)
    col = jax.lax.broadcasted_iota(jnp.int32, x_ref.shape, 1) + hj * thw
    a = jnp.abs(x_ref[...]).astype(jnp.float32)
    a = jnp.where(col < hw, a, 0.0)                # mask padded lanes of edge tile

    tile_max = jnp.max(a, axis=-1, keepdims=True)

    @pl.when(hj == 0)
    def _():
        m_ref[...] = tile_max

    @pl.when(hj > 0)
    def _():
        m_ref[...] = jnp.maximum(m_ref[...], tile_max)


def _apply_scale_kernel(x_ref, m_ref, o_ref):
    # HW-tiled pass 2: broadcast multiply by 1 / max.
    inv = pl.reciprocal(m_ref[...])
    o_ref[...] = (x_ref[...].astype(jnp.float32) * inv).astype(o_ref.dtype)


# --------------------------------------------------------------------------
# Wrappers
# --------------------------------------------------------------------------

def _scale_channelwise_hw_tiled(x2, budget, vmem_limit):
    """Two-pass path when a single channel block would not fit the budget."""
    C, HW = x2.shape
    itemsize = x2.dtype.itemsize
    cb = 8 if C >= 8 else C

    thw = max(128, (budget // max(cb * itemsize, 1)) // 128 * 128)
    if thw >= HW:
        thw = HW
    n_c = pl.cdiv(C, cb)
    n_h = pl.cdiv(HW, thw)

    # Pass 1: per-channel abs-max. HW axis last, "arbitrary", output resident.
    m = pl.pallas_call(
        functools.partial(_absmax_kernel, hw=HW, thw=thw),
        out_shape=jax.ShapeDtypeStruct((C, 1), jnp.float32),
        grid=(n_c, n_h),
        in_specs=[pl.BlockSpec((cb, thw), lambda i, j: (i, j))],
        out_specs=pl.BlockSpec((cb, 1), lambda i, j: (i, 0)),
        compiler_params=_compiler_params(("parallel", "arbitrary"), vmem_limit),
        cost_estimate=pl.CostEstimate(
            flops=C * HW, transcendentals=0,
            bytes_accessed=C * HW * itemsize + C * 4),
    )(x2)

    # Pass 2: scale every HW tile by the per-channel reciprocal.
    out = pl.pallas_call(
        _apply_scale_kernel,
        out_shape=jax.ShapeDtypeStruct((C, HW), x2.dtype),
        grid=(n_c, n_h),
        in_specs=[pl.BlockSpec((cb, thw), lambda i, j: (i, j)),
                  pl.BlockSpec((cb, 1), lambda i, j: (i, 0))],
        out_specs=pl.BlockSpec((cb, thw), lambda i, j: (i, j)),
        compiler_params=_compiler_params(("parallel", "parallel"), vmem_limit),
        cost_estimate=pl.CostEstimate(
            flops=C * HW, transcendentals=C,
            bytes_accessed=2 * C * HW * itemsize + C * 4),
    )(x2, m)
    return out


def scale_channelwise(x: jax.Array, *, block_byte_budget=None) -> jax.Array:
    """x: (C, H, W) -> x / max_{h,w} |x[c, h, w]| per channel."""
    C, H, W = x.shape
    HW = H * W
    itemsize = x.dtype.itemsize
    x2 = x.reshape(C, HW)          # free for contiguous input; lane-dense

    budget, vmem_limit = _generation_params()
    if block_byte_budget is not None:
        budget = block_byte_budget
    row_bytes = HW * itemsize

    # If even a minimal legal channel block (8 rows, or all of C when C < 8)
    # overflows the budget, tile the spatial axis with the two-pass kernel.
    if min(C, 8) * row_bytes > budget:
        return _scale_channelwise_hw_tiled(x2, budget, vmem_limit).reshape(C, H, W)

    cb = _choose_channel_block(C, row_bytes, budget)
    grid = (pl.cdiv(C, cb),)

    out2 = pl.pallas_call(
        _scale_channelwise_kernel,
        out_shape=jax.ShapeDtypeStruct((C, HW), x.dtype),
        grid=grid,
        in_specs=[pl.BlockSpec((cb, HW), lambda i: (i, 0))],
        out_specs=pl.BlockSpec((cb, HW), lambda i: (i, 0)),
        compiler_params=_compiler_params(("parallel",), vmem_limit),
        cost_estimate=pl.CostEstimate(
            flops=2 * C * HW, transcendentals=C,
            bytes_accessed=2 * C * HW * itemsize),
    )(x2)
    return out2.reshape(C, H, W)


def scale_channelwise_ref(x: jax.Array) -> jax.Array:
    """Pure-JAX reference mirroring the PyTorch forward exactly."""
    return x / jnp.max(jnp.abs(x), axis=(1, 2), keepdims=True)


if __name__ == "__main__":
    key = jax.random.PRNGKey(0)

    # Small channels-first shapes, including a non-128-multiple spatial plane,
    # C < 8, and a channel count that does not tile evenly.
    shapes = [(4, 16, 16), (16, 32, 48), (3, 30, 30), (20, 17, 13)]
    keys = jax.random.split(key, len(shapes) + 1)

    for k, shape in zip(keys[:-1], shapes):
        x = jax.random.normal(k, shape, dtype=jnp.float32)
        out = scale_channelwise(x)
        jax.block_until_ready(out)
        ref = scale_channelwise_ref(x)
        assert out.shape == ref.shape and out.dtype == ref.dtype
        assert jnp.allclose(out, ref, atol=1e-6, rtol=1e-6), shape

    # Exercise the HW-tiled two-pass path by forcing a tiny block budget.
    x = jax.random.normal(keys[-1], (16, 24, 40), dtype=jnp.float32)
    out = scale_channelwise(x, block_byte_budget=16 * 1024)
    jax.block_until_ready(out)
    ref = scale_channelwise_ref(x)
    assert jnp.allclose(out, ref, atol=1e-6, rtol=1e-6)

    print("KERNEL_OK")
</pallas_src>

<mosaic_0001>
module attributes {stable_mosaic.version = 11 : i64} {
  func.func @_scale_channelwise_kernel(%arg0: i32, %arg1: memref<4x256xf32, #tpu.memory_space<vmem>>, %arg2: memref<4x256xf32, #tpu.memory_space<vmem>>) attributes {dimension_semantics = [#tpu.dimension_semantics<parallel>], iteration_bounds = array<i64: 1>, scalar_prefetch = 0 : i64, scratch_operands = 0 : i64, tpu.core_type = #tpu.core_type<tc>, window_params = [{transform_indices = @transform_0, window_bounds = array<i64: 4, 256>}, {transform_indices = @transform_1, window_bounds = array<i64: 4, 256>}]} {
    %c0 = arith.constant 0 : index
    %c0_0 = arith.constant 0 : index
    %0 = vector.load %arg1[%c0, %c0_0] : memref<4x256xf32, #tpu.memory_space<vmem>>, vector<4x256xf32>
    %1 = math.absf %0 : vector<4x256xf32>
    %cst = arith.constant dense<0xFF800000> : vector<4xf32>
    %2 = vector.multi_reduction <maximumf>, %1, %cst [1] : vector<4x256xf32> to vector<4xf32>
    %3 = vector.shape_cast %2 : vector<4xf32> to vector<4x1xf32>
    %4 = tpu.reciprocal %3 : vector<4x1xf32> -> vector<4x1xf32>
    %c0_1 = arith.constant 0 : index
    %c0_2 = arith.constant 0 : index
    %5 = vector.load %arg1[%c0_1, %c0_2] : memref<4x256xf32, #tpu.memory_space<vmem>>, vector<4x256xf32>
    %6 = vector.broadcast %4 : vector<4x1xf32> to vector<4x256xf32>
    %7 = arith.mulf %5, %6 : vector<4x256xf32>
    %c0_3 = arith.constant 0 : index
    %c0_4 = arith.constant 0 : index
    %8 = vector.load %arg2[%c0_3, %c0_4] : memref<4x256xf32, #tpu.memory_space<vmem>>, vector<4x256xf32>
    tpu.vector_store %arg2[%c0_3, %c0_4], %7 {strides = array<i32>} : memref<4x256xf32, #tpu.memory_space<vmem>>, vector<4x256xf32>,
    return
  }
  func.func @transform_0(%arg0: i32) -> (i32, i32) {
    %c0_i32 = arith.constant 0 : i32
    %c0_i32_0 = arith.constant 0 : i32
    return %arg0, %c0_i32 : i32, i32
  }
  func.func @transform_1(%arg0: i32) -> (i32, i32) {
    %c0_i32 = arith.constant 0 : i32
    %c0_i32_0 = arith.constant 0 : i32
    return %arg0, %c0_i32 : i32, i32
  }
}

</mosaic_0001>

<llo_original>
// kernel: tpu_custom_call.1
$region0: #{tpu_custom_call.1}
  #allocation0 [shape = 'u32[]', space=smem, size = 0x4, offset = 0x4, fixed_abs, tag = 'smem constant byte address 0x4 - core index']
  #allocation1 [shape = 'u32[144,128]{1,0:T(1,128)}', space=vmem, size = 0x12000, scoped, tag = 'internal scratch']
  %s0 = inlined_call_operand.hbm [shape: f32[4,256], index: 0, kind: input, shape index: {}]
  %s1 = inlined_call_operand.hbm [shape: f32[4,256], index: 1, kind: output, shape index: {}]
  %s2 = sld [smem:[#allocation0]]
  $region18: #{tpu_custom_call.1} parent=0
    _
  %s4 = ssub.s32 1, %s2
  %s5 = scalar_select 0, %s4, %s2
  $region1: #{tpu_custom_call.1} parent=0
    #allocation2 [shape = 'u8[4096]{0}', space=vmem, size = 0x1000, scoped, tag = 'input window, operand 0, single buffered']
    #allocation3 [shape = 's32[1]{0}', space=sflag, size = 0x4, scoped, tag = 'scoped memory for tpu_custom_call.1']
    #allocation4 [shape = 's32[1]{0}', space=sflag, size = 0x4, scoped, tag = 'scoped memory for tpu_custom_call.1']
    #allocation5 [shape = 'u8[4096]{0}', space=vmem, size = 0x1000, scoped, tag = 'output window, operand 0, single buffered']
    %6 = vsyncpa [#allocation3], 0
    %7 = vsyncpa [#allocation4], 0
    // Predicated region
    $region2: #{tpu_custom_call.1} parent=1 // pred_check
      _
    $region3: #{tpu_custom_call.1} parent=1 // pred_check_branch
      %9 = sbr.rel (0) target = $region5
    $region4: #{tpu_custom_call.1} parent=1 // pred_region
      %s11 = ssub.s32 128, 128
      %12 = vsyncadd [#allocation3], %s11
      %s14 = sshll.u32 [#allocation2], 4
      %s15 = int_to_ptr.vmem [resolvable:$true] %s14
      %17 = dma.hbm_to_vmem [thread:$0]  %s0, 128, %s15, [#allocation3]
    $region5: #{tpu_custom_call.1} parent=1 // pred_fallthru
      _
    // Predicated region
    $region6: #{tpu_custom_call.1} parent=1 // pred_check
      _
    $region7: #{tpu_custom_call.1} parent=1 // pred_check_branch
      %19 = sbr.rel (0) target = $region9
    $region8: #{tpu_custom_call.1} parent=1 // pred_region
      %20 = dma.done [#allocation3], 128
    $region9: #{tpu_custom_call.1} parent=1 // pred_fallthru
      _
    %v21 = vld [vmem:[#allocation2] sm:$0xff]
    %v22 = vand.u32 2147483647, %v21
    %v24 = vcombine.high %v22, %v22
    %vm26 = vcmask 1043456
    %v27 = vsel %vm26, %v22, -inf
    %v28 = vsel %vm26, %v24, -inf
    %v29 = vmax.f32 %v27, %v28
    %30 = vmax.xlane.f32.xlu0 %v29
    %v31 = vpop.xlane.xlu0 %30
    %v32 = vrcp.pop %v31
    %v35 = vunpack.c.l.s4 839922192
    %v36 = vunpack.c.0.s8 %v35
    %v37 = vlaneseq
    %v38 = vshrl.u32 %v37, 7
    %v39 = vsub.s32 %v36, %v38
    %v40 = vrot.slane %v32, %v39
    %v42 = vmul.f32 %v21, %v40
    %43 = vst [vmem:[#allocation5] sm:$0xff] %v42
    // Predicated region
    $region10: #{tpu_custom_call.1} parent=1 // pred_check
      _
    $region11: #{tpu_custom_call.1} parent=1 // pred_check_branch
      %45 = sbr.rel (0) target = $region13
    $region12: #{tpu_custom_call.1} parent=1 // pred_region
      %s47 = ssub.s32 128, 128
      %48 = vsyncadd [#allocation4], %s47
      %s50 = sshll.u32 [#allocation5], 4
      %s51 = int_to_ptr.vmem [resolvable:$true] %s50
      %53 = dma.vmem_to_hbm [thread:$0]  %s51, 128, %s1, [#allocation4]
    $region13: #{tpu_custom_call.1} parent=1 // pred_fallthru
      _
    // Predicated region
    $region14: #{tpu_custom_call.1} parent=1 // pred_check
      _
    $region15: #{tpu_custom_call.1} parent=1 // pred_check_branch
      %55 = sbr.rel (0) target = $region17
    $region16: #{tpu_custom_call.1} parent=1 // pred_region
      %56 = dma.done [#allocation4], 128
    $region17: #{tpu_custom_call.1} parent=1 // pred_fallthru
      _
    %57 = vsyncpa [#allocation3], 1
    %58 = vsyncpa [#allocation4], 1

</llo_original>
